<compile_context>
chip_gen: v5e
topology: v5e:2x2
jax: 0.10.0
libtpu: 0.0.40
codegen_flags: <defaults>
</compile_context>

<pallas_src>
import functools

import jax
import jax.numpy as jnp
import numpy as np
from jax import lax
from jax.experimental import pallas as pl
from jax.experimental.pallas import tpu as pltpu

C_IN = 4
C_OUT = 64
KSIZE = 6
POOL = 3
WIN = POOL + KSIZE - 1          # 8 padded positions feeding one pooled output
KC = WIN * C_IN                 # 32 = im2col contraction size
NEXP = POOL * C_OUT             # 192 = phase-expanded conv output width
BN_EPS = 1e-5


def _deephage_kernel(xc_ref, wc_ref, vec_ref, w1_ref, o_ref, *, tb, lp, lp8):
    # xc_ref : (TB*Lp8, 32) bf16  phase-folded im2col rows (one row per pooled position)
    # wc_ref : (32, 192) bf16     conv weight expanded over the 3 pool phases along N
    # vec_ref: (8, 64) f32        row0=conv bias, row1=fc1 bias (BN1 folded),
    #                             row2=fc2 row (BN2 folded), row[3,0]=fc2 bias (BN2 folded)
    # w1_ref : (64, 64) bf16      fc1 weight with BN1 scale and the mean's 1/Lp folded in
    # o_ref  : (1, 1, TB) f32     lane-dense logit row for this batch block

    # Conv1d(4->64, k=6, 'same') for all 3 pool phases in ONE matmul (phases live in N).
    h = jnp.dot(xc_ref[...], wc_ref[...], preferred_element_type=jnp.float32)   # (TB*Lp8, 192)

    # MaxPool1d(3): elementwise max over the 3 phase column blocks.  The per-channel conv
    # bias and ReLU commute with max, so apply them once, after the max.
    pooled = jnp.maximum(jnp.maximum(h[:, 0:C_OUT], h[:, C_OUT:2 * C_OUT]),
                         h[:, 2 * C_OUT:3 * C_OUT])                              # (TB*Lp8, 64)
    pooled = jnp.maximum(pooled + vec_ref[0:1, :], 0.0)

    pooled = pooled.reshape(tb, lp8, C_OUT)
    if lp8 != lp:  # mask zero-padded pooled positions (the bias makes them nonzero after ReLU)
        rid = lax.broadcasted_iota(jnp.int32, (1, lp8, 1), 1)
        pooled = jnp.where(rid < lp, pooled, 0.0)

    # Sum over the pooled sequence dim; the mean's 1/Lp is folded into w1_ref on the host.
    msum = jnp.sum(pooled, axis=1)                                               # (TB, 64)

    # fc1 (BN1 + 1/Lp folded) + ReLU.
    f = jnp.dot(msum.astype(w1_ref.dtype), w1_ref[...],
                preferred_element_type=jnp.float32) + vec_ref[1:2, :]
    f = jnp.maximum(f, 0.0)

    # fc2 (BN2 folded) as an NT matmul: (1,64) x (TB,64)^T -> lane-dense (1, TB) row.
    logit = lax.dot_general(vec_ref[2:3, :], f, (((1,), (1,)), ((), ())),
                            preferred_element_type=jnp.float32)                  # (1, TB)
    o_ref[0] = logit + vec_ref[3:4, 0:1]


def _choose_tb(B, lp8):
    # VMEM bytes per (sample, pooled-position), including 128-lane padding:
    #   input bf16 (x2 double buffering) + f32 conv output (192->256 lanes) + f32 pooled (+slack).
    per_row = 2 * (128 * 2) + 256 * 4 + 2 * (128 * 4)            # ~2.5 KiB
    tb = (12 << 20) // (per_row * lp8)                           # ~12 MiB working-set budget
    tb = max(8, min(256, (tb // 8) * 8))
    if B <= tb:
        if B > 8:
            # Prefer two grid steps so the "parallel" batch axis shards across both v7x TCs.
            tb = max(8, (((B + 1) // 2 + 7) // 8) * 8)
        else:
            tb = 8
    return tb


@functools.partial(jax.jit, static_argnames=("compute_dtype",))
def deephage_forward(x, params, *, compute_dtype=jnp.bfloat16):
    """x: (B, L, 4) float32 (one-hot DNA) -> (B, 1) float32, matching DeePhage.forward (eval)."""
    B, L, _ = x.shape
    Lp = L // POOL                                   # MaxPool1d(3) floor truncation
    Lp8 = ((Lp + 7) // 8) * 8                        # sublane-aligned pooled length
    TB = _choose_tb(B, Lp8)
    Bp = ((B + TB - 1) // TB) * TB
    G = Bp // TB

    # Batch pad + torch 'same' padding for k=6 (left 2); right pad covers the last (padded) window.
    right = POOL * Lp8 + POOL - L
    xpad = jnp.pad(x, ((0, Bp - B), (2, right), (0, 0)))

    # Phase-folded im2col: xcol[b*Lp8 + i, 4*p + c] = xpad[b, 3*i + p, c],  p in [0, 8).
    idx = POOL * np.arange(Lp8)[:, None] + np.arange(WIN)[None, :]          # (Lp8, 8)
    xcol = xpad[:, idx, :].reshape(Bp * Lp8, KC).astype(compute_dtype)      # (Bp*Lp8, 32)

    # ---- parameter folding (host glue) ----
    w24 = jnp.transpose(params["conv_w"], (2, 1, 0)).reshape(KSIZE * C_IN, C_OUT)  # [4k+c, o]
    wexp = jnp.zeros((KC, NEXP), jnp.float32)
    for j in range(POOL):                            # three 3-tap-shifted copies of the kernel
        wexp = wexp.at[C_IN * j:C_IN * j + KSIZE * C_IN, C_OUT * j:C_OUT * (j + 1)].set(w24)
    wexp = wexp.astype(compute_dtype)

    s1 = params["bn1_gamma"] * lax.rsqrt(params["bn1_var"] + BN_EPS)
    t1 = params["bn1_beta"] - params["bn1_mean"] * s1
    w1T = params["fc1_w"].T                                                 # (in, out)
    w1eff = ((s1[:, None] * w1T) / Lp).astype(compute_dtype)                # BN1 + 1/Lp folded
    b1eff = t1 @ w1T + params["fc1_b"]
    s2 = params["bn2_gamma"] * lax.rsqrt(params["bn2_var"] + BN_EPS)
    t2 = params["bn2_beta"] - params["bn2_mean"] * s2
    w2row = params["fc2_w"][0]
    w2eff = s2 * w2row                                                      # BN2 folded into fc2
    b2eff = jnp.dot(t2, w2row) + params["fc2_b"][0]

    vec = jnp.zeros((8, C_OUT), jnp.float32)
    vec = vec.at[0].set(params["conv_b"])
    vec = vec.at[1].set(b1eff)
    vec = vec.at[2].set(w2eff)
    vec = vec.at[3, 0].set(b2eff)

    bytes_in = xcol.size * 2 + wexp.size * 2 + vec.size * 4 + w1eff.size * 2
    cost = pl.CostEstimate(
        flops=2 * Bp * Lp8 * KC * NEXP + 2 * Bp * C_OUT * C_OUT + 2 * Bp * C_OUT,
        transcendentals=0,
        bytes_accessed=bytes_in + Bp * 4,
    )

    kernel = functools.partial(_deephage_kernel, tb=TB, lp=Lp, lp8=Lp8)
    out = pl.pallas_call(
        kernel,
        out_shape=jax.ShapeDtypeStruct((G, 1, TB), jnp.float32),
        grid=(G,),
        in_specs=[
            pl.BlockSpec((TB * Lp8, KC), lambda b: (b, 0)),
            pl.BlockSpec((KC, NEXP), lambda b: (0, 0)),
            pl.BlockSpec((8, C_OUT), lambda b: (0, 0)),
            pl.BlockSpec((C_OUT, C_OUT), lambda b: (0, 0)),
        ],
        out_specs=pl.BlockSpec((1, 1, TB), lambda b: (b, 0, 0)),
        compiler_params=pltpu.CompilerParams(
            dimension_semantics=("parallel",),
            vmem_limit_bytes=32 * 1024 * 1024,
        ),
        cost_estimate=cost,
    )(xcol, wexp, vec, w1eff)

    return out.reshape(Bp, 1)[:B]                                            # (B, 1)


def ref_forward(x, p):
    """Plain-JAX f32 reference reproducing the PyTorch forward (eval mode)."""
    B, L, _ = x.shape
    xp = jnp.pad(x, ((0, 0), (2, 3), (0, 0)))
    h = jnp.zeros((B, L, C_OUT), jnp.float32) + p["conv_b"]
    for k in range(KSIZE):
        h = h + jnp.einsum("blc,oc->blo", xp[:, k:k + L, :], p["conv_w"][:, :, k])
    h = jnp.maximum(h, 0.0)
    Lp = L // POOL
    pooled = h[:, :POOL * Lp, :].reshape(B, Lp, POOL, C_OUT).max(axis=2)
    y = (pooled - p["bn1_mean"]) / jnp.sqrt(p["bn1_var"] + BN_EPS) * p["bn1_gamma"] + p["bn1_beta"]
    m = y.mean(axis=1)                                                       # (B, 64)
    f = jnp.maximum(m @ p["fc1_w"].T + p["fc1_b"], 0.0)
    f = (f - p["bn2_mean"]) / jnp.sqrt(p["bn2_var"] + BN_EPS) * p["bn2_gamma"] + p["bn2_beta"]
    return f @ p["fc2_w"].T + p["fc2_b"]                                     # (B, 1)


if __name__ == "__main__":
    B, L = 2, 96                    # max_length = 96 -> feature_size = 32
    key = jax.random.PRNGKey(0)
    keys = jax.random.split(key, 16)
    params = {
        "conv_w": 0.1 * jax.random.normal(keys[0], (C_OUT, C_IN, KSIZE), jnp.float32),
        "conv_b": 0.1 * jax.random.normal(keys[1], (C_OUT,), jnp.float32),
        "bn1_gamma": 1.0 + 0.1 * jax.random.normal(keys[2], (C_OUT,), jnp.float32),
        "bn1_beta": 0.1 * jax.random.normal(keys[3], (C_OUT,), jnp.float32),
        "bn1_mean": 0.1 * jax.random.normal(keys[4], (C_OUT,), jnp.float32),
        "bn1_var": jax.random.uniform(keys[5], (C_OUT,), jnp.float32, 0.5, 1.5),
        "fc1_w": 0.1 * jax.random.normal(keys[6], (C_OUT, C_OUT), jnp.float32),
        "fc1_b": 0.1 * jax.random.normal(keys[7], (C_OUT,), jnp.float32),
        "bn2_gamma": 1.0 + 0.1 * jax.random.normal(keys[8], (C_OUT,), jnp.float32),
        "bn2_beta": 0.1 * jax.random.normal(keys[9], (C_OUT,), jnp.float32),
        "bn2_mean": 0.1 * jax.random.normal(keys[10], (C_OUT,), jnp.float32),
        "bn2_var": jax.random.uniform(keys[11], (C_OUT,), jnp.float32, 0.5, 1.5),
        "fc2_w": 0.1 * jax.random.normal(keys[12], (1, C_OUT), jnp.float32),
        "fc2_b": 0.1 * jax.random.normal(keys[13], (1,), jnp.float32),
    }
    # DeePhage's real input is one-hot encoded DNA, so the bf16 activation cast is exact.
    idx = jax.random.randint(keys[14], (B, L), 0, C_IN)
    x = jax.nn.one_hot(idx, C_IN, dtype=jnp.float32)

    out = jax.block_until_ready(deephage_forward(x, params))
    ref = ref_forward(x, params)
    assert out.shape == (B, 1), out.shape
    assert jnp.allclose(out, ref, atol=1e-2, rtol=1e-2), (out, ref)
    print("KERNEL_OK")
</pallas_src>

<mosaic_0001>
module attributes {stable_mosaic.version = 11 : i64} {
  func.func @_deephage_kernel(%arg0: i32, %arg1: memref<256x32xbf16, #tpu.memory_space<vmem>>, %arg2: memref<32x192xbf16, #tpu.memory_space<vmem>>, %arg3: memref<8x64xf32, #tpu.memory_space<vmem>>, %arg4: memref<64x64xbf16, #tpu.memory_space<vmem>>, %arg5: memref<1x1x8xf32, #tpu.memory_space<vmem>>) attributes {dimension_semantics = [#tpu.dimension_semantics<parallel>], iteration_bounds = array<i64: 1>, scalar_prefetch = 0 : i64, scratch_operands = 0 : i64, tpu.core_type = #tpu.core_type<tc>, window_params = [{transform_indices = @transform_0, window_bounds = array<i64: 256, 32>}, {pipeline_mode = #tpu.pipeline_mode<synchronous>, transform_indices = @transform_1, window_bounds = array<i64: 32, 192>}, {pipeline_mode = #tpu.pipeline_mode<synchronous>, transform_indices = @transform_2, window_bounds = array<i64: 8, 64>}, {pipeline_mode = #tpu.pipeline_mode<synchronous>, transform_indices = @transform_3, window_bounds = array<i64: 64, 64>}, {transform_indices = @transform_4, window_bounds = array<i64: 1, 1, 8>}]} {
    %c0 = arith.constant 0 : index
    %c0_0 = arith.constant 0 : index
    %0 = vector.load %arg1[%c0, %c0_0] : memref<256x32xbf16, #tpu.memory_space<vmem>>, vector<256x32xbf16>
    %c0_1 = arith.constant 0 : index
    %c0_2 = arith.constant 0 : index
    %1 = vector.load %arg2[%c0_1, %c0_2] : memref<32x192xbf16, #tpu.memory_space<vmem>>, vector<32x192xbf16>
    %cst = arith.constant dense<0.000000e+00> : vector<256x192xf32>
    %2 = tpu.matmul %0, %1, %cst {dimension_numbers = #tpu.dot_dimension_numbers<[1], [0], [0], [1], [0, 0, 1, 1], [], []>} : vector<256x32xbf16>, vector<32x192xbf16>, vector<256x192xf32> -> vector<256x192xf32>
    %3 = vector.extract_strided_slice %2 {offsets = [0, 0], sizes = [256, 64], strides = [1, 1]} : vector<256x192xf32> to vector<256x64xf32>
    %4 = vector.extract_strided_slice %2 {offsets = [0, 64], sizes = [256, 64], strides = [1, 1]} : vector<256x192xf32> to vector<256x64xf32>
    %5 = arith.maximumf %3, %4 : vector<256x64xf32>
    %6 = vector.extract_strided_slice %2 {offsets = [0, 128], sizes = [256, 64], strides = [1, 1]} : vector<256x192xf32> to vector<256x64xf32>
    %7 = arith.maximumf %5, %6 : vector<256x64xf32>
    %c0_3 = arith.constant 0 : index
    %c0_4 = arith.constant 0 : index
    %8 = vector.load %arg3[%c0_3, %c0_4] : memref<8x64xf32, #tpu.memory_space<vmem>>, vector<1x64xf32>
    %9 = vector.broadcast %8 : vector<1x64xf32> to vector<256x64xf32>
    %10 = arith.addf %7, %9 : vector<256x64xf32>
    %cst_5 = arith.constant 0.000000e+00 : f32
    %11 = vector.broadcast %cst_5 : f32 to vector<256x64xf32>
    %12 = arith.maximumf %10, %11 : vector<256x64xf32>
    %13 = vector.shape_cast %12 : vector<256x64xf32> to vector<8x32x64xf32>
    %cst_6 = arith.constant dense<0.000000e+00> : vector<8x64xf32>
    %14 = vector.multi_reduction <add>, %13, %cst_6 [1] : vector<8x32x64xf32> to vector<8x64xf32>
    %15 = arith.truncf %14 : vector<8x64xf32> to vector<8x64xbf16>
    %c0_7 = arith.constant 0 : index
    %c0_8 = arith.constant 0 : index
    %16 = vector.load %arg4[%c0_7, %c0_8] : memref<64x64xbf16, #tpu.memory_space<vmem>>, vector<64x64xbf16>
    %cst_9 = arith.constant dense<0.000000e+00> : vector<8x64xf32>
    %17 = tpu.matmul %15, %16, %cst_9 {dimension_numbers = #tpu.dot_dimension_numbers<[1], [0], [0], [1], [0, 0, 1, 1], [], []>} : vector<8x64xbf16>, vector<64x64xbf16>, vector<8x64xf32> -> vector<8x64xf32>
    %c1 = arith.constant 1 : index
    %c0_10 = arith.constant 0 : index
    %18 = vector.load %arg3[%c1, %c0_10] : memref<8x64xf32, #tpu.memory_space<vmem>>, vector<1x64xf32>
    %19 = vector.broadcast %18 : vector<1x64xf32> to vector<8x64xf32>
    %20 = arith.addf %17, %19 : vector<8x64xf32>
    %cst_11 = arith.constant 0.000000e+00 : f32
    %21 = vector.broadcast %cst_11 : f32 to vector<8x64xf32>
    %22 = arith.maximumf %20, %21 : vector<8x64xf32>
    %c2 = arith.constant 2 : index
    %c0_12 = arith.constant 0 : index
    %23 = vector.load %arg3[%c2, %c0_12] : memref<8x64xf32, #tpu.memory_space<vmem>>, vector<1x64xf32>
    %cst_13 = arith.constant dense<0.000000e+00> : vector<1x8xf32>
    %24 = tpu.matmul %23, %22, %cst_13 {dimension_numbers = #tpu.dot_dimension_numbers<[1], [1], [0], [0], [0, 0, 1, 0], [], []>} : vector<1x64xf32>, vector<8x64xf32>, vector<1x8xf32> -> vector<1x8xf32>
    %c3 = arith.constant 3 : index
    %c0_14 = arith.constant 0 : index
    %25 = vector.load %arg3[%c3, %c0_14] : memref<8x64xf32, #tpu.memory_space<vmem>>, vector<1x1xf32>
    %26 = vector.broadcast %25 : vector<1x1xf32> to vector<1x8xf32>
    %27 = arith.addf %24, %26 : vector<1x8xf32>
    %c0_15 = arith.constant 0 : index
    %c0_16 = arith.constant 0 : index
    %c0_17 = arith.constant 0 : index
    %28 = vector.load %arg5[%c0_15, %c0_16, %c0_17] : memref<1x1x8xf32, #tpu.memory_space<vmem>>, vector<1x1x8xf32>
    %29 = vector.shape_cast %28 : vector<1x1x8xf32> to vector<1x8xf32>
    %30 = vector.shape_cast %27 : vector<1x8xf32> to vector<1x1x8xf32>
    tpu.vector_store %arg5[%c0_15, %c0_16, %c0_17], %30 {strides = array<i32>} : memref<1x1x8xf32, #tpu.memory_space<vmem>>, vector<1x1x8xf32>,
    return
  }
  func.func @transform_0(%arg0: i32) -> (i32, i32) {
    %c0_i32 = arith.constant 0 : i32
    %c0_i32_0 = arith.constant 0 : i32
    return %arg0, %c0_i32 : i32, i32
  }
  func.func @transform_1(%arg0: i32) -> (i32, i32) {
    %c0_i32 = arith.constant 0 : i32
    %c0_i32_0 = arith.constant 0 : i32
    %c0_i32_1 = arith.constant 0 : i32
    return %c0_i32, %c0_i32_0 : i32, i32
  }
  func.func @transform_2(%arg0: i32) -> (i32, i32) {
    %c0_i32 = arith.constant 0 : i32
    %c0_i32_0 = arith.constant 0 : i32
    %c0_i32_1 = arith.constant 0 : i32
    return %c0_i32, %c0_i32_0 : i32, i32
  }
  func.func @transform_3(%arg0: i32) -> (i32, i32) {
    %c0_i32 = arith.constant 0 : i32
    %c0_i32_0 = arith.constant 0 : i32
    %c0_i32_1 = arith.constant 0 : i32
    return %c0_i32, %c0_i32_0 : i32, i32
  }
  func.func @transform_4(%arg0: i32) -> (i32, i32, i32) {
    %c0_i32 = arith.constant 0 : i32
    %c0_i32_0 = arith.constant 0 : i32
    %c0_i32_1 = arith.constant 0 : i32
    return %arg0, %c0_i32, %c0_i32_0 : i32, i32, i32
  }
}

</mosaic_0001>

<llo_original>
// kernel: deephage_forward.1
$region0: #{deephage_forward.1}
  #allocation0 [shape = 'u32[]', space=smem, size = 0x4, offset = 0x4, fixed_abs, tag = 'smem constant byte address 0x4 - core index']
  #allocation1 [shape = 'u32[72,128]{1,0:T(1,128)}', space=vmem, size = 0x9000, scoped, tag = 'internal scratch']
  %s0 = inlined_call_operand.vmem [shape: bf16[256,32], index: 0, kind: input, shape index: {}]
  %s1 = inlined_call_operand.vmem [shape: bf16[32,192], index: 1, kind: input, shape index: {}]
  %s2 = inlined_call_operand.vmem [shape: f32[8,64], index: 2, kind: input, shape index: {}]
  %s3 = inlined_call_operand.vmem [shape: bf16[64,64], index: 3, kind: input, shape index: {}]
  %s4 = inlined_call_operand.vmem [shape: f32[1,1,8], index: 4, kind: output, shape index: {}]
  %s5 = sld [smem:[#allocation0]]
  $region26: #{deephage_forward.1} parent=0
    _
  %s7 = ssub.s32 1, %s5
  %s8 = scalar_select 0, %s7, %s5
  // Predicated region
  $region2: #{deephage_forward.1} parent=0 // pred_check
    _
  $region3: #{deephage_forward.1} parent=0 // pred_check_branch
    %10 = sbr.rel (0) target = $region5
  $region4: #{deephage_forward.1} parent=0 // pred_region
    _
  $region5: #{deephage_forward.1} parent=0 // pred_fallthru
    _
  // Predicated region
  $region6: #{deephage_forward.1} parent=0 // pred_check
    _
  $region7: #{deephage_forward.1} parent=0 // pred_check_branch
    %12 = sbr.rel (0) target = $region9
  $region8: #{deephage_forward.1} parent=0 // pred_region
    _
  $region9: #{deephage_forward.1} parent=0 // pred_fallthru
    _
  // Predicated region
  $region10: #{deephage_forward.1} parent=0 // pred_check
    _
  $region11: #{deephage_forward.1} parent=0 // pred_check_branch
    %14 = sbr.rel (0) target = $region13
  $region12: #{deephage_forward.1} parent=0 // pred_region
    _
  $region13: #{deephage_forward.1} parent=0 // pred_fallthru
    _
  // Predicated region
  $region14: #{deephage_forward.1} parent=0 // pred_check
    _
  $region15: #{deephage_forward.1} parent=0 // pred_check_branch
    %16 = sbr.rel (0) target = $region17
  $region16: #{deephage_forward.1} parent=0 // pred_region
    _
  $region17: #{deephage_forward.1} parent=0 // pred_fallthru
    _
  %v18 = vld [vmem:[%s0] sm:$0xf]
  %v19 = vld [vmem:[%s0 + $0x4] sm:$0xf]
  %v20 = vld [vmem:[%s0 + $0x8] sm:$0xf]
  %v21 = vld [vmem:[%s0 + $0xc] sm:$0xf]
  %v22 = vld [vmem:[%s0 + $0x10] sm:$0xf]
  %v23 = vld [vmem:[%s0 + $0x14] sm:$0xf]
  %v24 = vld [vmem:[%s0 + $0x18] sm:$0xf]
  %v25 = vld [vmem:[%s0 + $0x1c] sm:$0xf]
  %v26 = vld [vmem:[%s0 + $0x20] sm:$0xf]
  %v27 = vld [vmem:[%s0 + $0x24] sm:$0xf]
  %v28 = vld [vmem:[%s0 + $0x28] sm:$0xf]
  %v29 = vld [vmem:[%s0 + $0x2c] sm:$0xf]
  %v30 = vld [vmem:[%s0 + $0x30] sm:$0xf]
  %v31 = vld [vmem:[%s0 + $0x34] sm:$0xf]
  %v32 = vld [vmem:[%s0 + $0x38] sm:$0xf]
  %v33 = vld [vmem:[%s0 + $0x3c] sm:$0xf]
  %v34 = vld [vmem:[%s0 + $0x40] sm:$0xf]
  %v35 = vld [vmem:[%s0 + $0x44] sm:$0xf]
  %v36 = vld [vmem:[%s0 + $0x48] sm:$0xf]
  %v37 = vld [vmem:[%s0 + $0x4c] sm:$0xf]
  %v38 = vld [vmem:[%s0 + $0x50] sm:$0xf]
  %v39 = vld [vmem:[%s0 + $0x54] sm:$0xf]
  %v40 = vld [vmem:[%s0 + $0x58] sm:$0xf]
  %v41 = vld [vmem:[%s0 + $0x5c] sm:$0xf]
  %v42 = vld [vmem:[%s0 + $0x60] sm:$0xf]
  %v43 = vld [vmem:[%s0 + $0x64] sm:$0xf]
  %v44 = vld [vmem:[%s0 + $0x68] sm:$0xf]
  %v45 = vld [vmem:[%s0 + $0x6c] sm:$0xf]
  %v46 = vld [vmem:[%s0 + $0x70] sm:$0xf]
  %v47 = vld [vmem:[%s0 + $0x74] sm:$0xf]
  %v48 = vld [vmem:[%s0 + $0x78] sm:$0xf]
  %v49 = vld [vmem:[%s0 + $0x7c] sm:$0xf]
  %v50 = vld [vmem:[%s1] sm:$0xff]
  %v51 = vld [vmem:[%s1 + $0x8] sm:$0xff]
  %v52 = vld [vmem:[%s1 + $0x10] sm:$0xff]
  %v53 = vld [vmem:[%s1 + $0x18] sm:$0xff]
  %v86 = vunpack.c.l.b16 %v18
  %v87 = vunpack.c.l.b16 %v19
  %v88 = vunpack.c.l.b16 %v20
  %v89 = vunpack.c.l.b16 %v21
  %v90 = vunpack.c.l.b16 %v22
  %v91 = vunpack.c.l.b16 %v23
  %v92 = vunpack.c.l.b16 %v24
  %v93 = vunpack.c.l.b16 %v25
  %v94 = vunpack.c.l.b16 %v26
  %v95 = vunpack.c.l.b16 %v27
  %v96 = vunpack.c.l.b16 %v28
  %v97 = vunpack.c.l.b16 %v29
  %v98 = vunpack.c.l.b16 %v30
  %v99 = vunpack.c.l.b16 %v31
  %v100 = vunpack.c.l.b16 %v32
  %v101 = vunpack.c.l.b16 %v33
  %v102 = vunpack.c.l.b16 %v34
  %v103 = vunpack.c.l.b16 %v35
  %v104 = vunpack.c.l.b16 %v36
  %v105 = vunpack.c.l.b16 %v37
  %v106 = vunpack.c.l.b16 %v38
  %v107 = vunpack.c.l.b16 %v39
  %v108 = vunpack.c.l.b16 %v40
  %v109 = vunpack.c.l.b16 %v41
  %v110 = vunpack.c.l.b16 %v42
  %v111 = vunpack.c.l.b16 %v43
  %v112 = vunpack.c.l.b16 %v44
  %v113 = vunpack.c.l.b16 %v45
  %v114 = vunpack.c.l.b16 %v46
  %v115 = vunpack.c.l.b16 %v47
  %v116 = vunpack.c.l.b16 %v48
  %v117 = vunpack.c.l.b16 %v49
  %v118 = vpack.c.b16 %v87, %v86
  %v119 = vpack.c.b16 %v89, %v88
  %v120 = vpack.c.b16 %v91, %v90
  %v121 = vpack.c.b16 %v93, %v92
  %v122 = vpack.c.b16 %v95, %v94
  %v123 = vpack.c.b16 %v97, %v96
  %v124 = vpack.c.b16 %v99, %v98
  %v125 = vpack.c.b16 %v101, %v100
  %v126 = vpack.c.b16 %v103, %v102
  %v127 = vpack.c.b16 %v105, %v104
  %v128 = vpack.c.b16 %v107, %v106
  %v129 = vpack.c.b16 %v109, %v108
  %v130 = vpack.c.b16 %v111, %v110
  %v131 = vpack.c.b16 %v113, %v112
  %v132 = vpack.c.b16 %v115, %v114
  %v133 = vpack.c.b16 %v117, %v116
  %v138 = vunpack.c.l.b16 %v50
  %v139 = vunpack.c.h.b16 %v50
  %v140 = vunpack.c.l.b16 %v51
  %v141 = vunpack.c.h.b16 %v51
  %v142 = vunpack.c.l.b16 %v52
  %v143 = vunpack.c.h.b16 %v52
  %v144 = vunpack.c.l.b16 %v53
  %v145 = vunpack.c.h.b16 %v53
  %v146 = vpack.c.b16 %v140, %v138
  %v147 = vpack.c.b16 %v141, %v139
  %v148 = vpack.c.b16 %v144, %v142
  %v149 = vpack.c.b16 %v145, %v143
  %vm154 = vcmask 261120
  %v156 = vsel %vm154, %v118, 0
  %v159 = vsel %vm154, %v119, 0
  %v162 = vsel %vm154, %v120, 0
  %v165 = vsel %vm154, %v121, 0
  %v168 = vsel %vm154, %v122, 0
  %v171 = vsel %vm154, %v123, 0
  %v174 = vsel %vm154, %v124, 0
  %v177 = vsel %vm154, %v125, 0
  %v180 = vsel %vm154, %v126, 0
  %v183 = vsel %vm154, %v127, 0
  %v186 = vsel %vm154, %v128, 0
  %v189 = vsel %vm154, %v129, 0
  %v192 = vsel %vm154, %v130, 0
  %v195 = vsel %vm154, %v131, 0
  %v198 = vsel %vm154, %v132, 0
  %v201 = vsel %vm154, %v133, 0
  %203 = vmatpush.bf16.msra.mxu0 0
  %204 = vmatpush.bf16.msra.mxu0 0
  %205 = vmatpush.bf16.msra.mxu0 0
  %206 = vmatpush.bf16.msra.mxu0 0
  %207 = vmatpush.bf16.msra.mxu0 0
  %208 = vmatpush.bf16.msra.mxu0 0
  %209 = vmatpush.bf16.msra.mxu0 %v148
  %210 = vmatpush.bf16.msra.mxu0 %v146
  %211 = vmatmul.bf16.gmra.mxu0 %v156
  %v212 = vpop.f32.mrf.mxu0
  %v213 = vadd.f32 0.0, %v212
  %v214 = vpop.f32.mrf.mxu0
  %v215 = vadd.f32 0.0, %v214
  %216 = vmatmul.bf16.gmra.mxu0 %v159
  %v217 = vpop.f32.mrf.mxu0
  %v218 = vadd.f32 0.0, %v217
  %v219 = vpop.f32.mrf.mxu0
  %v220 = vadd.f32 0.0, %v219
  %221 = vmatmul.bf16.gmra.mxu0 %v162
  %v222 = vpop.f32.mrf.mxu0
  %v223 = vadd.f32 0.0, %v222
  %v224 = vpop.f32.mrf.mxu0
  %v225 = vadd.f32 0.0, %v224
  %226 = vmatmul.bf16.gmra.mxu0 %v165
  %v227 = vpop.f32.mrf.mxu0
  %v228 = vadd.f32 0.0, %v227
  %v229 = vpop.f32.mrf.mxu0
  %v230 = vadd.f32 0.0, %v229
  %231 = vmatmul.bf16.gmra.mxu0 %v168
  %v232 = vpop.f32.mrf.mxu0
  %v233 = vadd.f32 0.0, %v232
  %v234 = vpop.f32.mrf.mxu0
  %v235 = vadd.f32 0.0, %v234
  %236 = vmatmul.bf16.gmra.mxu0 %v171
  %v237 = vpop.f32.mrf.mxu0
  %v238 = vadd.f32 0.0, %v237
  %v239 = vpop.f32.mrf.mxu0
  %v240 = vadd.f32 0.0, %v239
  %241 = vmatmul.bf16.gmra.mxu0 %v174
  %v242 = vpop.f32.mrf.mxu0
  %v243 = vadd.f32 0.0, %v242
  %v244 = vpop.f32.mrf.mxu0
  %v245 = vadd.f32 0.0, %v244
  %246 = vmatmul.bf16.gmra.mxu0 %v177
  %v247 = vpop.f32.mrf.mxu0
  %v248 = vadd.f32 0.0, %v247
  %v249 = vpop.f32.mrf.mxu0
  %v250 = vadd.f32 0.0, %v249
  %251 = vmatmul.bf16.gmra.mxu0 %v180
  %v252 = vpop.f32.mrf.mxu0
  %v253 = vadd.f32 0.0, %v252
  %v254 = vpop.f32.mrf.mxu0
  %v255 = vadd.f32 0.0, %v254
  %256 = vmatmul.bf16.gmra.mxu0 %v183
  %v257 = vpop.f32.mrf.mxu0
  %v258 = vadd.f32 0.0, %v257
  %v259 = vpop.f32.mrf.mxu0
  %v260 = vadd.f32 0.0, %v259
  %261 = vmatmul.bf16.gmra.mxu0 %v186
  %v262 = vpop.f32.mrf.mxu0
  %v263 = vadd.f32 0.0, %v262
  %v264 = vpop.f32.mrf.mxu0
  %v265 = vadd.f32 0.0, %v264
  %266 = vmatmul.bf16.gmra.mxu0 %v189
  %v267 = vpop.f32.mrf.mxu0
  %v268 = vadd.f32 0.0, %v267
  %v269 = vpop.f32.mrf.mxu0
  %v270 = vadd.f32 0.0, %v269
  %271 = vmatmul.bf16.gmra.mxu0 %v192
  %v272 = vpop.f32.mrf.mxu0
  %v273 = vadd.f32 0.0, %v272
  %v274 = vpop.f32.mrf.mxu0
  %v275 = vadd.f32 0.0, %v274
  %276 = vmatmul.bf16.gmra.mxu0 %v195
  %v277 = vpop.f32.mrf.mxu0
  %v278 = vadd.f32 0.0, %v277
  %v279 = vpop.f32.mrf.mxu0
  %v280 = vadd.f32 0.0, %v279
  %281 = vmatmul.bf16.gmra.mxu0 %v198
  %v282 = vpop.f32.mrf.mxu0
  %v283 = vadd.f32 0.0, %v282
  %v284 = vpop.f32.mrf.mxu0
  %v285 = vadd.f32 0.0, %v284
  %286 = vmatmul.bf16.gmra.mxu0 %v201
  %v287 = vpop.f32.mrf.mxu0
  %v288 = vadd.f32 0.0, %v287
  %v289 = vpop.f32.mrf.mxu0
  %v290 = vadd.f32 0.0, %v289
  %291 = vdwg.mxu0
  %292 = vmatpush.bf16.msra.mxu0 0
  %293 = vmatpush.bf16.msra.mxu0 0
  %294 = vmatpush.bf16.msra.mxu0 0
  %295 = vmatpush.bf16.msra.mxu0 0
  %296 = vmatpush.bf16.msra.mxu0 0
  %297 = vmatpush.bf16.msra.mxu0 0
  %298 = vmatpush.bf16.msra.mxu0 %v149
  %299 = vmatpush.bf16.msra.mxu0 %v147
  %300 = vmatmul.bf16.gmra.mxu0 %v156
  %v301 = vpop.f32.mrf.mxu0
  %v302 = vadd.f32 0.0, %v301
  %v303 = vpop.f32.mrf.mxu0
  %v304 = vadd.f32 0.0, %v303
  %305 = vmatmul.bf16.gmra.mxu0 %v159
  %v306 = vpop.f32.mrf.mxu0
  %v307 = vadd.f32 0.0, %v306
  %v308 = vpop.f32.mrf.mxu0
  %v309 = vadd.f32 0.0, %v308
  %310 = vmatmul.bf16.gmra.mxu0 %v162
  %v311 = vpop.f32.mrf.mxu0
  %v312 = vadd.f32 0.0, %v311
  %v313 = vpop.f32.mrf.mxu0
  %v314 = vadd.f32 0.0, %v313
  %315 = vmatmul.bf16.gmra.mxu0 %v165
  %v316 = vpop.f32.mrf.mxu0
  %v317 = vadd.f32 0.0, %v316
  %v318 = vpop.f32.mrf.mxu0
  %v319 = vadd.f32 0.0, %v318
  %320 = vmatmul.bf16.gmra.mxu0 %v168
  %v321 = vpop.f32.mrf.mxu0
  %v322 = vadd.f32 0.0, %v321
  %v323 = vpop.f32.mrf.mxu0
  %v324 = vadd.f32 0.0, %v323
  %325 = vmatmul.bf16.gmra.mxu0 %v171
  %v326 = vpop.f32.mrf.mxu0
  %v327 = vadd.f32 0.0, %v326
  %v328 = vpop.f32.mrf.mxu0
  %v329 = vadd.f32 0.0, %v328
  %330 = vmatmul.bf16.gmra.mxu0 %v174
  %v331 = vpop.f32.mrf.mxu0
  %v332 = vadd.f32 0.0, %v331
  %v333 = vpop.f32.mrf.mxu0
  %v334 = vadd.f32 0.0, %v333
  %335 = vmatmul.bf16.gmra.mxu0 %v177
  %v336 = vpop.f32.mrf.mxu0
  %v337 = vadd.f32 0.0, %v336
  %v338 = vpop.f32.mrf.mxu0
  %v339 = vadd.f32 0.0, %v338
  %340 = vmatmul.bf16.gmra.mxu0 %v180
  %v341 = vpop.f32.mrf.mxu0
  %v342 = vadd.f32 0.0, %v341
  %v343 = vpop.f32.mrf.mxu0
  %v344 = vadd.f32 0.0, %v343
  %345 = vmatmul.bf16.gmra.mxu0 %v183
  %v346 = vpop.f32.mrf.mxu0
  %v347 = vadd.f32 0.0, %v346
  %v348 = vpop.f32.mrf.mxu0
  %v349 = vadd.f32 0.0, %v348
  %350 = vmatmul.bf16.gmra.mxu0 %v186
  %v351 = vpop.f32.mrf.mxu0
  %v352 = vadd.f32 0.0, %v351
  %v353 = vpop.f32.mrf.mxu0
  %v354 = vadd.f32 0.0, %v353
  %355 = vmatmul.bf16.gmra.mxu0 %v189
  %v356 = vpop.f32.mrf.mxu0
  %v357 = vadd.f32 0.0, %v356
  %v358 = vpop.f32.mrf.mxu0
  %v359 = vadd.f32 0.0, %v358
  %360 = vmatmul.bf16.gmra.mxu0 %v192
  %v361 = vpop.f32.mrf.mxu0
  %v362 = vadd.f32 0.0, %v361
  %v363 = vpop.f32.mrf.mxu0
  %v364 = vadd.f32 0.0, %v363
  %365 = vmatmul.bf16.gmra.mxu0 %v195
  %v366 = vpop.f32.mrf.mxu0
  %v367 = vadd.f32 0.0, %v366
  %v368 = vpop.f32.mrf.mxu0
  %v369 = vadd.f32 0.0, %v368
  %370 = vmatmul.bf16.gmra.mxu0 %v198
  %v371 = vpop.f32.mrf.mxu0
  %v372 = vadd.f32 0.0, %v371
  %v373 = vpop.f32.mrf.mxu0
  %v374 = vadd.f32 0.0, %v373
  %375 = vmatmul.bf16.gmra.mxu0 %v201
  %v376 = vpop.f32.mrf.mxu0
  %v377 = vadd.f32 0.0, %v376
  %v378 = vpop.f32.mrf.mxu0
  %v379 = vadd.f32 0.0, %v378
  %380 = vdwg.mxu0
  %413 = vrot.lane.b32.xlu0 %v213, 64
  %v414 = vpop.permute.xlu0 %413
  %415 = vrot.lane.b32.xlu0 %v215, 64
  %v416 = vpop.permute.xlu0 %415
  %417 = vrot.lane.b32.xlu0 %v218, 64
  %v418 = vpop.permute.xlu0 %417
  %419 = vrot.lane.b32.xlu0 %v220, 64
  %v420 = vpop.permute.xlu0 %419
  %421 = vrot.lane.b32.xlu0 %v223, 64
  %v422 = vpop.permute.xlu0 %421
  %423 = vrot.lane.b32.xlu0 %v225, 64
  %v424 = vpop.permute.xlu0 %423
  %425 = vrot.lane.b32.xlu0 %v228, 64
  %v426 = vpop.permute.xlu0 %425
  %427 = vrot.lane.b32.xlu0 %v230, 64
  %v428 = vpop.permute.xlu0 %427
  %429 = vrot.lane.b32.xlu0 %v233, 64
  %v430 = vpop.permute.xlu0 %429
  %431 = vrot.lane.b32.xlu0 %v235, 64
  %v432 = vpop.permute.xlu0 %431
  %433 = vrot.lane.b32.xlu0 %v238, 64
  %v434 = vpop.permute.xlu0 %433
  %435 = vrot.lane.b32.xlu0 %v240, 64
  %v436 = vpop.permute.xlu0 %435
  %437 = vrot.lane.b32.xlu0 %v243, 64
  %v438 = vpop.permute.xlu0 %437
  %439 = vrot.lane.b32.xlu0 %v245, 64
  %v440 = vpop.permute.xlu0 %439
  %441 = vrot.lane.b32.xlu0 %v248, 64
  %v442 = vpop.permute.xlu0 %441
  %443 = vrot.lane.b32.xlu0 %v250, 64
  %v444 = vpop.permute.xlu0 %443
  %445 = vrot.lane.b32.xlu0 %v253, 64
  %v446 = vpop.permute.xlu0 %445
  %447 = vrot.lane.b32.xlu0 %v255, 64
  %v448 = vpop.permute.xlu0 %447
  %449 = vrot.lane.b32.xlu0 %v258, 64
  %v450 = vpop.permute.xlu0 %449
  %451 = vrot.lane.b32.xlu0 %v260, 64
  %v452 = vpop.permute.xlu0 %451
  %453 = vrot.lane.b32.xlu0 %v263, 64
  %v454 = vpop.permute.xlu0 %453
  %455 = vrot.lane.b32.xlu0 %v265, 64
  %v456 = vpop.permute.xlu0 %455
  %457 = vrot.lane.b32.xlu0 %v268, 64
  %v458 = vpop.permute.xlu0 %457
  %459 = vrot.lane.b32.xlu0 %v270, 64
  %v460 = vpop.permute.xlu0 %459
  %461 = vrot.lane.b32.xlu0 %v273, 64
  %v462 = vpop.permute.xlu0 %461
  %463 = vrot.lane.b32.xlu0 %v275, 64
  %v464 = vpop.permute.xlu0 %463
  %465 = vrot.lane.b32.xlu0 %v278, 64
  %v466 = vpop.permute.xlu0 %465
  %467 = vrot.lane.b32.xlu0 %v280, 64
  %v468 = vpop.permute.xlu0 %467
  %469 = vrot.lane.b32.xlu0 %v283, 64
  %v470 = vpop.permute.xlu0 %469
  %471 = vrot.lane.b32.xlu0 %v285, 64
  %v472 = vpop.permute.xlu0 %471
  %473 = vrot.lane.b32.xlu0 %v288, 64
  %v474 = vpop.permute.xlu0 %473
  %475 = vrot.lane.b32.xlu0 %v290, 64
  %v476 = vpop.permute.xlu0 %475
  %v509 = vmax.f32 %v213, %v414
  %v510 = vmax.f32 %v215, %v416
  %v511 = vmax.f32 %v218, %v418
  %v512 = vmax.f32 %v220, %v420
  %v513 = vmax.f32 %v223, %v422
  %v514 = vmax.f32 %v225, %v424
  %v515 = vmax.f32 %v228, %v426
  %v516 = vmax.f32 %v230, %v428
  %v517 = vmax.f32 %v233, %v430
  %v518 = vmax.f32 %v235, %v432
  %v519 = vmax.f32 %v238, %v434
  %v520 = vmax.f32 %v240, %v436
  %v521 = vmax.f32 %v243, %v438
  %v522 = vmax.f32 %v245, %v440
  %v523 = vmax.f32 %v248, %v442
  %v524 = vmax.f32 %v250, %v444
  %v525 = vmax.f32 %v253, %v446
  %v526 = vmax.f32 %v255, %v448
  %v527 = vmax.f32 %v258, %v450
  %v528 = vmax.f32 %v260, %v452
  %v529 = vmax.f32 %v263, %v454
  %v530 = vmax.f32 %v265, %v456
  %v531 = vmax.f32 %v268, %v458
  %v532 = vmax.f32 %v270, %v460
  %v533 = vmax.f32 %v273, %v462
  %v534 = vmax.f32 %v275, %v464
  %v535 = vmax.f32 %v278, %v466
  %v536 = vmax.f32 %v280, %v468
  %v537 = vmax.f32 %v283, %v470
  %v538 = vmax.f32 %v285, %v472
  %v539 = vmax.f32 %v288, %v474
  %v540 = vmax.f32 %v290, %v476
  %v541 = vmax.f32 %v509, %v302
  %v542 = vmax.f32 %v510, %v304
  %v543 = vmax.f32 %v511, %v307
  %v544 = vmax.f32 %v512, %v309
  %v545 = vmax.f32 %v513, %v312
  %v546 = vmax.f32 %v514, %v314
  %v547 = vmax.f32 %v515, %v317
  %v548 = vmax.f32 %v516, %v319
  %v549 = vmax.f32 %v517, %v322
  %v550 = vmax.f32 %v518, %v324
  %v551 = vmax.f32 %v519, %v327
  %v552 = vmax.f32 %v520, %v329
  %v553 = vmax.f32 %v521, %v332
  %v554 = vmax.f32 %v522, %v334
  %v555 = vmax.f32 %v523, %v337
  %v556 = vmax.f32 %v524, %v339
  %v557 = vmax.f32 %v525, %v342
  %v558 = vmax.f32 %v526, %v344
  %v559 = vmax.f32 %v527, %v347
  %v560 = vmax.f32 %v528, %v349
  %v561 = vmax.f32 %v529, %v352
  %v562 = vmax.f32 %v530, %v354
  %v563 = vmax.f32 %v531, %v357
  %v564 = vmax.f32 %v532, %v359
  %v565 = vmax.f32 %v533, %v362
  %v566 = vmax.f32 %v534, %v364
  %v567 = vmax.f32 %v535, %v367
  %v568 = vmax.f32 %v536, %v369
  %v569 = vmax.f32 %v537, %v372
  %v570 = vmax.f32 %v538, %v374
  %v571 = vmax.f32 %v539, %v377
  %v572 = vmax.f32 %v540, %v379
  %v573 = vld [vmem:[%s2] sm:$0x1]
  %v574 = vperm.slane %v573, 0
  %v575 = vadd.f32 %v541, %v574
  %v576 = vadd.f32 %v542, %v574
  %v577 = vadd.f32 %v543, %v574
  %v578 = vadd.f32 %v544, %v574
  %v579 = vadd.f32 %v545, %v574
  %v580 = vadd.f32 %v546, %v574
  %v581 = vadd.f32 %v547, %v574
  %v582 = vadd.f32 %v548, %v574
  %v583 = vadd.f32 %v549, %v574
  %v584 = vadd.f32 %v550, %v574
  %v585 = vadd.f32 %v551, %v574
  %v586 = vadd.f32 %v552, %v574
  %v587 = vadd.f32 %v553, %v574
  %v588 = vadd.f32 %v554, %v574
  %v589 = vadd.f32 %v555, %v574
  %v590 = vadd.f32 %v556, %v574
  %v591 = vadd.f32 %v557, %v574
  %v592 = vadd.f32 %v558, %v574
  %v593 = vadd.f32 %v559, %v574
  %v594 = vadd.f32 %v560, %v574
  %v595 = vadd.f32 %v561, %v574
  %v596 = vadd.f32 %v562, %v574
  %v597 = vadd.f32 %v563, %v574
  %v598 = vadd.f32 %v564, %v574
  %v599 = vadd.f32 %v565, %v574
  %v600 = vadd.f32 %v566, %v574
  %v601 = vadd.f32 %v567, %v574
  %v602 = vadd.f32 %v568, %v574
  %v603 = vadd.f32 %v569, %v574
  %v604 = vadd.f32 %v570, %v574
  %v605 = vadd.f32 %v571, %v574
  %v606 = vadd.f32 %v572, %v574
  %v607 = vmax.f32 %v575, 0.0
  %v608 = vmax.f32 %v576, 0.0
  %v609 = vmax.f32 %v577, 0.0
  %v610 = vmax.f32 %v578, 0.0
  %v611 = vmax.f32 %v579, 0.0
  %v612 = vmax.f32 %v580, 0.0
  %v613 = vmax.f32 %v581, 0.0
  %v614 = vmax.f32 %v582, 0.0
  %v615 = vmax.f32 %v583, 0.0
  %v616 = vmax.f32 %v584, 0.0
  %v617 = vmax.f32 %v585, 0.0
  %v618 = vmax.f32 %v586, 0.0
  %v619 = vmax.f32 %v587, 0.0
  %v620 = vmax.f32 %v588, 0.0
  %v621 = vmax.f32 %v589, 0.0
  %v622 = vmax.f32 %v590, 0.0
  %v623 = vmax.f32 %v591, 0.0
  %v624 = vmax.f32 %v592, 0.0
  %v625 = vmax.f32 %v593, 0.0
  %v626 = vmax.f32 %v594, 0.0
  %v627 = vmax.f32 %v595, 0.0
  %v628 = vmax.f32 %v596, 0.0
  %v629 = vmax.f32 %v597, 0.0
  %v630 = vmax.f32 %v598, 0.0
  %v631 = vmax.f32 %v599, 0.0
  %v632 = vmax.f32 %v600, 0.0
  %v633 = vmax.f32 %v601, 0.0
  %v634 = vmax.f32 %v602, 0.0
  %v635 = vmax.f32 %v603, 0.0
  %v636 = vmax.f32 %v604, 0.0
  %v637 = vmax.f32 %v605, 0.0
  %v638 = vmax.f32 %v606, 0.0
  %vm639 = vcmask 523264
  %v640 = vsel %vm639, %v607, 0.0
  %v641 = vsel %vm639, %v608, 0.0
  %v642 = vadd.f32 %v640, %v641
  %v643 = vsel %vm639, %v609, 0.0
  %v644 = vadd.f32 %v642, %v643
  %v645 = vsel %vm639, %v610, 0.0
  %v646 = vadd.f32 %v644, %v645
  %v647 = vrot.slane %v646, 4
  %v648 = vadd.f32 %v646, %v647
  %v649 = vrot.slane %v648, 2
  %v650 = vadd.f32 %v648, %v649
  %v651 = vrot.slane %v650, 1
  %v652 = vadd.f32 %v650, %v651
  %v653 = vsel %vm639, %v611, 0.0
  %v654 = vsel %vm639, %v612, 0.0
  %v655 = vadd.f32 %v653, %v654
  %v656 = vsel %vm639, %v613, 0.0
  %v657 = vadd.f32 %v655, %v656
  %v658 = vsel %vm639, %v614, 0.0
  %v659 = vadd.f32 %v657, %v658
  %v660 = vrot.slane %v659, 4
  %v661 = vadd.f32 %v659, %v660
  %v662 = vrot.slane %v661, 2
  %v663 = vadd.f32 %v661, %v662
  %v664 = vrot.slane %v663, 1
  %v665 = vadd.f32 %v663, %v664
  %v666 = vsel %vm639, %v615, 0.0
  %v667 = vsel %vm639, %v616, 0.0
  %v668 = vadd.f32 %v666, %v667
  %v669 = vsel %vm639, %v617, 0.0
  %v670 = vadd.f32 %v668, %v669
  %v671 = vsel %vm639, %v618, 0.0
  %v672 = vadd.f32 %v670, %v671
  %v673 = vrot.slane %v672, 4
  %v674 = vadd.f32 %v672, %v673
  %v675 = vrot.slane %v674, 2
  %v676 = vadd.f32 %v674, %v675
  %v677 = vrot.slane %v676, 1
  %v678 = vadd.f32 %v676, %v677
  %v679 = vsel %vm639, %v619, 0.0
  %v680 = vsel %vm639, %v620, 0.0
  %v681 = vadd.f32 %v679, %v680
  %v682 = vsel %vm639, %v621, 0.0
  %v683 = vadd.f32 %v681, %v682
  %v684 = vsel %vm639, %v622, 0.0
  %v685 = vadd.f32 %v683, %v684
  %v686 = vrot.slane %v685, 4
  %v687 = vadd.f32 %v685, %v686
  %v688 = vrot.slane %v687, 2
  %v689 = vadd.f32 %v687, %v688
  %v690 = vrot.slane %v689, 1
  %v691 = vadd.f32 %v689, %v690
  %v692 = vsel %vm639, %v623, 0.0
  %v693 = vsel %vm639, %v624, 0.0
  %v694 = vadd.f32 %v692, %v693
  %v695 = vsel %vm639, %v625, 0.0
  %v696 = vadd.f32 %v694, %v695
  %v697 = vsel %vm639, %v626, 0.0
  %v698 = vadd.f32 %v696, %v697
  %v699 = vrot.slane %v698, 4
  %v700 = vadd.f32 %v698, %v699
  %v701 = vrot.slane %v700, 2
  %v702 = vadd.f32 %v700, %v701
  %v703 = vrot.slane %v702, 1
  %v704 = vadd.f32 %v702, %v703
  %v705 = vsel %vm639, %v627, 0.0
  %v706 = vsel %vm639, %v628, 0.0
  %v707 = vadd.f32 %v705, %v706
  %v708 = vsel %vm639, %v629, 0.0
  %v709 = vadd.f32 %v707, %v708
  %v710 = vsel %vm639, %v630, 0.0
  %v711 = vadd.f32 %v709, %v710
  %v712 = vrot.slane %v711, 4
  %v713 = vadd.f32 %v711, %v712
  %v714 = vrot.slane %v713, 2
  %v715 = vadd.f32 %v713, %v714
  %v716 = vrot.slane %v715, 1
  %v717 = vadd.f32 %v715, %v716
  %v718 = vsel %vm639, %v631, 0.0
  %v719 = vsel %vm639, %v632, 0.0
  %v720 = vadd.f32 %v718, %v719
  %v721 = vsel %vm639, %v633, 0.0
  %v722 = vadd.f32 %v720, %v721
  %v723 = vsel %vm639, %v634, 0.0
  %v724 = vadd.f32 %v722, %v723
  %v725 = vrot.slane %v724, 4
  %v726 = vadd.f32 %v724, %v725
  %v727 = vrot.slane %v726, 2
  %v728 = vadd.f32 %v726, %v727
  %v729 = vrot.slane %v728, 1
  %v730 = vadd.f32 %v728, %v729
  %v731 = vsel %vm639, %v635, 0.0
  %v732 = vsel %vm639, %v636, 0.0
  %v733 = vadd.f32 %v731, %v732
  %v734 = vsel %vm639, %v637, 0.0
  %v735 = vadd.f32 %v733, %v734
  %v736 = vsel %vm639, %v638, 0.0
  %v737 = vadd.f32 %v735, %v736
  %v738 = vrot.slane %v737, 4
  %v739 = vadd.f32 %v737, %v738
  %v740 = vrot.slane %v739, 2
  %v741 = vadd.f32 %v739, %v740
  %v742 = vrot.slane %v741, 1
  %v743 = vadd.f32 %v741, %v742
  %v744 = vpack.c.bf16 %v652, %v652
  %v745 = vpack.c.bf16 %v665, %v665
  %v746 = vpack.c.bf16 %v678, %v678
  %v747 = vpack.c.bf16 %v691, %v691
  %v748 = vpack.c.bf16 %v704, %v704
  %v749 = vpack.c.bf16 %v717, %v717
  %v750 = vpack.c.bf16 %v730, %v730
  %v751 = vpack.c.bf16 %v743, %v743
  %v752 = vld [vmem:[%s3] sm:$0xf]
  %v753 = vld [vmem:[%s3 + $0x4] sm:$0xf]
  %v754 = vld [vmem:[%s3 + $0x8] sm:$0xf]
  %v755 = vld [vmem:[%s3 + $0xc] sm:$0xf]
  %v756 = vld [vmem:[%s3 + $0x10] sm:$0xf]
  %v757 = vld [vmem:[%s3 + $0x14] sm:$0xf]
  %v758 = vld [vmem:[%s3 + $0x18] sm:$0xf]
  %v759 = vld [vmem:[%s3 + $0x1c] sm:$0xf]
  %v760 = vld [vmem:[%s2 + $0x1] sm:$0x1]
  %v761 = vperm.slane %v760, 0
  %v770 = vunpack.c.l.b16 %v744
  %v771 = vunpack.c.l.b16 %v745
  %v772 = vunpack.c.l.b16 %v746
  %v773 = vunpack.c.l.b16 %v747
  %v774 = vunpack.c.l.b16 %v748
  %v775 = vunpack.c.l.b16 %v749
  %v776 = vunpack.c.l.b16 %v750
  %v777 = vunpack.c.l.b16 %v751
  %vm778 = vcmask 1041409
  %v779 = vsel %vm778, %v771, %v770
  %vm780 = vcmask 1042434
  %v781 = vsel %vm780, %v772, %v779
  %vm782 = vcmask 1043459
  %v783 = vsel %vm782, %v773, %v781
  %vm784 = vcmask 1044484
  %v785 = vsel %vm784, %v774, %v783
  %vm786 = vcmask 1045509
  %v787 = vsel %vm786, %v775, %v785
  %vm788 = vcmask 1046534
  %v789 = vsel %vm788, %v776, %v787
  %vm790 = vcmask 1047559
  %v791 = vsel %vm790, %v777, %v789
  %v792 = vpack.c.b16 %v791, %v791
  %v801 = vunpack.c.l.b16 %v752
  %v802 = vunpack.c.l.b16 %v753
  %v803 = vunpack.c.l.b16 %v754
  %v804 = vunpack.c.l.b16 %v755
  %v805 = vunpack.c.l.b16 %v756
  %v806 = vunpack.c.l.b16 %v757
  %v807 = vunpack.c.l.b16 %v758
  %v808 = vunpack.c.l.b16 %v759
  %v809 = vpack.c.b16 %v802, %v801
  %v810 = vpack.c.b16 %v804, %v803
  %v811 = vpack.c.b16 %v806, %v805
  %v812 = vpack.c.b16 %v808, %v807
  %v818 = vsel %vm639, %v792, 0
  %820 = vmatpush.bf16.msra.mxu0 0
  %821 = vmatpush.bf16.msra.mxu0 0
  %822 = vmatpush.bf16.msra.mxu0 0
  %823 = vmatpush.bf16.msra.mxu0 0
  %824 = vmatpush.bf16.msra.mxu0 %v812
  %825 = vmatpush.bf16.msra.mxu0 %v811
  %826 = vmatpush.bf16.msra.mxu0 %v810
  %827 = vmatpush.bf16.msra.mxu0 %v809
  %828 = vmatmul.bf16.gmra.mxu0 %v818
  %v829 = vpop.f32.mrf.mxu0
  %v830 = vadd.f32 %v761, %v829
  %v831 = vpop.f32.mrf.mxu0
  %832 = vdwg.mxu0
  %v833 = vmax.f32 %v830, 0.0
  %v834 = vld [vmem:[%s2 + $0x2] sm:$0x1]
  %v835 = vld [vmem:[%s2 + $0x3] sm:$0x1]
  %837 = vset.pattern.permute.xlu0 0
  %838 = vperm.xlu0 %837, %v835
  %v839 = vpop.permute.xlu0 %838
  %v842 = vsel %vm639, %v834, 0
  %v845 = vsel %vm639, %v833, 0
  %847 = vmatpush.xpose.msra.mxu0 0.0
  %848 = vmatpush.xpose.msra.mxu0 0.0
  %849 = vmatpush.xpose.msra.mxu0 0.0
  %850 = vmatpush.xpose.msra.mxu0 0.0
  %851 = vmatpush.xpose.msra.mxu0 0.0
  %852 = vmatpush.xpose.msra.mxu0 0.0
  %853 = vmatpush.xpose.msra.mxu0 0.0
  %854 = vmatpush.xpose.msra.mxu0 0.0
  %855 = vmatpush.xpose.msra.mxu0 0.0
  %856 = vmatpush.xpose.msra.mxu0 0.0
  %857 = vmatpush.xpose.msra.mxu0 0.0
  %858 = vmatpush.xpose.msra.mxu0 0.0
  %859 = vmatpush.xpose.msra.mxu0 0.0
  %860 = vmatpush.xpose.msra.mxu0 0.0
  %861 = vmatpush.xpose.msra.mxu0 0.0
  %862 = vmatpush.xpose.msra.mxu0 %v845
  %863 = vmatmul.f32.gmra.mxu0 %v842
  %v864 = vpop.f32.mrf.mxu0
  %v865 = vadd.f32 %v839, %v864
  %866 = vdwg.mxu0
  %vm867 = vcmask 57344
  %868 = vst.msk [vmem:[%s4] sm:$0x1] %vm867, %v865
  // Predicated region
  $region18: #{deephage_forward.1} parent=0 // pred_check
    _
  $region19: #{deephage_forward.1} parent=0 // pred_check_branch
    %870 = sbr.rel (0) target = $region21
  $region20: #{deephage_forward.1} parent=0 // pred_region
    _
  $region21: #{deephage_forward.1} parent=0 // pred_fallthru
    _
  // Predicated region
  $region22: #{deephage_forward.1} parent=0 // pred_check
    _
  $region23: #{deephage_forward.1} parent=0 // pred_check_branch
    %872 = sbr.rel (0) target = $region25
  $region24: #{deephage_forward.1} parent=0 // pred_region
    _
  $region25: #{deephage_forward.1} parent=0 // pred_fallthru
    _

</llo_original>
